<compile_context>
chip_gen: v5e
topology: v5e:2x2
jax: 0.10.0
libtpu: 0.0.40
codegen_flags: <defaults>
</compile_context>

<pallas_src>
import math

import jax
import jax.numpy as jnp
from jax.experimental import pallas as pl
from jax.experimental.pallas import tpu as pltpu

_LANE = 128
_MAX_TH = 2048          # lane-axis tile cap (multiple of 128)
_MAX_TM = 2048          # row-axis tile cap


def _chip_config():
    """Generation-keyed VMEM budget/limit + megacore row-block target."""
    vmem_cap = 128 << 20
    try:
        info = pltpu.get_tpu_info()
        cap = getattr(info, "vmem_capacity_bytes", None)
        if cap:
            vmem_cap = int(cap)
    except Exception:
        pass
    is_v7 = False
    try:
        kind = jax.devices()[0].device_kind.lower()
        is_v7 = ("v7" in kind) or ("7x" in kind)
    except Exception:
        pass
    if is_v7 or vmem_cap <= (64 << 20):
        # v7x: 64 MiB VMEM per TC -> smaller budget, keep >=2 row blocks so the
        # leading "parallel" axis can be split across the 2 TensorCores.
        # TODO(synk): evaluate pltpu.CORE_PARALLEL on the row axis on v7x.
        return {"block_budget": 16 << 20, "vmem_limit": 48 << 20, "min_row_blocks": 2}
    # v5e / v6e: 128 MiB physical VMEM.
    return {"block_budget": 24 << 20, "vmem_limit": 64 << 20, "min_row_blocks": 1}


_CFG = _chip_config()


def _affine_kernel(x_ref, w_ref, b_ref, o_ref):
    # x: (TM, TH); w/b: (TM, TH) or (1, TH) (row-broadcast).
    # Trace-time branch: f32 inputs pass straight through; sub-32-bit inputs are
    # upcast to f32 for the multiply-add (v5e's VPU has no bf16 path).
    x, w, b = x_ref[...], w_ref[...], b_ref[...]
    if x.dtype != jnp.float32:
        x = x.astype(jnp.float32)
    if w.dtype != jnp.float32:
        w = w.astype(jnp.float32)
    if b.dtype != jnp.float32:
        b = b.astype(jnp.float32)
    o_ref[...] = (x * w + b).astype(o_ref.dtype)


def _sublane(dtype):
    # Native sublane packing: 8 rows (4-byte), 16 (2-byte), 32 (1-byte).
    return max(8, 32 // jnp.dtype(dtype).itemsize)


def _pick_th(H):
    """Lane-axis tile: full extent if small, else a 2048-wide (multiple of 128) tile."""
    return H if H <= _MAX_TH else _MAX_TH


def _pick_tm(M, th, n_streams, dtype):
    """Row tile: largest sublane-aligned tm with n_streams double-buffered (tm, th)
    blocks inside the chip-keyed VMEM budget; capped so v7x keeps >=2 row blocks."""
    itemsize = jnp.dtype(dtype).itemsize
    sub = _sublane(dtype)
    per_row = max(n_streams * 2 * th * itemsize, 1)
    tm = int(_CFG["block_budget"] // per_row)
    tm = min(tm, _MAX_TM)
    if _CFG["min_row_blocks"] > 1:
        tm = min(tm, -(-M // _CFG["min_row_blocks"]))
    tm = (tm // sub) * sub
    tm = max(tm, sub)
    if tm >= M:
        return M                  # full-extent block is always legal
    return tm                     # sublane multiple; partial edge blocks are masked


def affine_broadcast(x2d, w, b):
    """out[m, h] = x[m, h] * w[h] + b[h]  (row-broadcast affine)."""
    M, H = x2d.shape
    th = _pick_th(H)
    tm = _pick_tm(M, th, n_streams=2, dtype=x2d.dtype)   # x + out dominate traffic
    w2 = w.reshape(1, H)
    b2 = b.reshape(1, H)
    xo_spec = pl.BlockSpec((tm, th), lambda i, j: (i, j))
    wb_spec = pl.BlockSpec((1, th), lambda i, j: (0, j))
    nbytes = (2 * M * H * jnp.dtype(x2d.dtype).itemsize
              + H * (jnp.dtype(w.dtype).itemsize + jnp.dtype(b.dtype).itemsize))
    return pl.pallas_call(
        _affine_kernel,
        out_shape=jax.ShapeDtypeStruct((M, H), x2d.dtype),
        grid_spec=pltpu.PrefetchScalarGridSpec(
            num_scalar_prefetch=0,
            grid=(pl.cdiv(M, tm), pl.cdiv(H, th)),
            in_specs=[xo_spec, wb_spec, wb_spec],
            out_specs=xo_spec,
        ),
        compiler_params=pltpu.CompilerParams(
            dimension_semantics=("parallel", "parallel"),
            vmem_limit_bytes=_CFG["vmem_limit"],
        ),
        cost_estimate=pl.CostEstimate(
            flops=2 * M * H, transcendentals=0, bytes_accessed=int(nbytes)),
    )(x2d, w2, b2)


def affine_elemwise(x2d, w2d, b2d):
    """out[i, j] = x[i, j] * w[i, j] + b[i, j]  (pure elementwise affine)."""
    M, H = x2d.shape
    th = _pick_th(H)
    tm = _pick_tm(M, th, n_streams=4, dtype=x2d.dtype)   # x, w, b, out
    spec = pl.BlockSpec((tm, th), lambda i, j: (i, j))
    nbytes = M * H * (2 * jnp.dtype(x2d.dtype).itemsize
                      + jnp.dtype(w2d.dtype).itemsize
                      + jnp.dtype(b2d.dtype).itemsize)
    return pl.pallas_call(
        _affine_kernel,
        out_shape=jax.ShapeDtypeStruct((M, H), x2d.dtype),
        grid_spec=pltpu.PrefetchScalarGridSpec(
            num_scalar_prefetch=0,
            grid=(pl.cdiv(M, tm), pl.cdiv(H, th)),
            in_specs=[spec, spec, spec],
            out_specs=spec,
        ),
        compiler_params=pltpu.CompilerParams(
            dimension_semantics=("parallel", "parallel"),
            vmem_limit_bytes=_CFG["vmem_limit"],
        ),
        cost_estimate=pl.CostEstimate(
            flops=2 * M * H, transcendentals=0, bytes_accessed=int(nbytes)),
    )(x2d, w2d, b2d)


def _largest_lane_divisor(n, cap=_MAX_TH):
    """Largest multiple of 128 that divides n (up to cap); None if there is none."""
    best = None
    lanes = _LANE
    while lanes <= cap:
        if n % lanes == 0:
            best = lanes
        lanes += _LANE
    return best


def _affine_elemwise_any(x, w, b):
    """Elementwise x*w+b (x, w, b same shape), lane-dense Pallas without any padding."""
    shape = x.shape
    n = x.size
    H = shape[-1]
    # Fast path: last dim already lane-dense -> (M, H) directly, no flattening.
    if H % _LANE == 0:
        M = n // H
        return affine_elemwise(x.reshape(M, H), w.reshape(M, H),
                               b.reshape(M, H)).reshape(shape)
    xf = x.reshape(-1)
    wf = w.reshape(-1)
    bf = b.reshape(-1)
    lanes = _largest_lane_divisor(n)
    if lanes is not None:
        rows = n // lanes
        return affine_elemwise(xf.reshape(rows, lanes), wf.reshape(rows, lanes),
                               bf.reshape(rows, lanes)).reshape(shape)
    # No multiple-of-128 divisor: run Pallas on the lane-dense prefix and handle the
    # (<128-element) tail with a tiny jnp epilogue (no full-array jnp.pad copies).
    n_main = (n // _LANE) * _LANE
    if n_main == 0:
        return (x * w + b).astype(x.dtype)
    lanes = _largest_lane_divisor(n_main) or _LANE
    rows = n_main // lanes
    main = affine_elemwise(xf[:n_main].reshape(rows, lanes),
                           wf[:n_main].reshape(rows, lanes),
                           bf[:n_main].reshape(rows, lanes)).reshape(-1)
    tail = (xf[n_main:].astype(jnp.float32) * wf[n_main:].astype(jnp.float32)
            + bf[n_main:].astype(jnp.float32)).astype(x.dtype)
    return jnp.concatenate([main, tail]).reshape(shape)


def _affine_broadcast_any(x, w, b, H):
    """x: (..., *normalized_shape) -> (M, H); w/b: (H,). Lane-dense row-packing when
    H is not a multiple of 128, padding M up to a multiple of k if necessary (a single
    extra pass over x is cheaper than lane-sparse masked stores)."""
    M = x.size // H
    x2 = x.reshape(M, H)
    wf = w.reshape(H)
    bf = b.reshape(H)
    if H % _LANE == 0:
        return affine_broadcast(x2, wf, bf).reshape(x.shape)
    k = _LANE // math.gcd(H, _LANE)
    pad_rows = (-M) % k
    if pad_rows:
        x2 = jnp.pad(x2, ((0, pad_rows), (0, 0)))
    Mp = M + pad_rows
    out = affine_broadcast(x2.reshape(Mp // k, k * H), jnp.tile(wf, k), jnp.tile(bf, k))
    out = out.reshape(Mp, H)
    if pad_rows:
        out = out[:M]
    return out.reshape(x.shape)


class PerturbedAffine:
    """JAX/Pallas port of the PyTorch PerturbedAffine forward pass (direct=True only)."""

    def __init__(self, normalized_shape, directions, antithetic=False,
                 options=None, noise_dtype=None):
        if options is None:
            options = {"direct": True}
        if not options.get("direct"):
            raise NotImplementedError("Only direct is implemented")
        if isinstance(normalized_shape, int):
            normalized_shape = (normalized_shape,)
        if antithetic and directions % 2 != 0:
            raise ValueError("antithetic perturbation requires an even number of directions")
        self.normalized_shape = tuple(normalized_shape)
        self.directions = directions
        self.antithetic = antithetic
        self.options = options
        # Optional narrower storage dtype (e.g. jnp.bfloat16) for the x-sized noise
        # arrays -> ~25% less HBM traffic on the perturbed path. Default None keeps
        # the parameter dtype and bit-exact reference semantics.
        self.noise_dtype = noise_dtype
        # deterministic parameter init, same as the PyTorch __init__
        self.weight = jnp.ones(self.normalized_shape, jnp.float32)
        self.bias = jnp.zeros(self.normalized_shape, jnp.float32)
        self.perturbed_flag = False
        self.weight_noise = None
        self.bias_noise = None
        self.noise_scale = None
        # Below this element count, fused XLA elementwise beats pallas_call overhead.
        self.pallas_min_elems = 1 << 16

    def set_noise(self, key, noise_scale):
        # 'direct' option: *_noise = parameter + gaussian noise (antithetic mirroring).
        self.noise_scale = noise_scale
        kw, kb = jax.random.split(key)
        D = self.directions
        dt = self.weight.dtype

        def draw(k):
            if self.antithetic:
                eps = jax.random.normal(k, (D // 2,) + self.normalized_shape, dt) * noise_scale
                return jnp.concatenate([eps, -eps], axis=0)
            return jax.random.normal(k, (D,) + self.normalized_shape, dt) * noise_scale

        out_dt = self.noise_dtype or dt
        self.weight_noise = (self.weight + draw(kw)).astype(out_dt)
        self.bias_noise = (self.bias + draw(kb)).astype(out_dt)

    def __call__(self, x):
        H = math.prod(self.normalized_shape)
        if self.perturbed_flag:
            w, b = self.weight_noise, self.bias_noise
        else:
            w, b = self.weight, self.bias

        if x.size < self.pallas_min_elems:
            # Tiny problem: skip the pallas_call launch/pipeline overhead.
            return (x * w + b).astype(x.dtype)

        if self.perturbed_flag:
            if x.shape != w.shape:
                # TODO(synk): general broadcast between x and per-direction noise
                # (rare in practice) falls back to fused XLA elementwise.
                return (x * w + b).astype(x.dtype)
            return _affine_elemwise_any(x, w, b)
        return _affine_broadcast_any(x, w, b, H)


if __name__ == "__main__":
    key = jax.random.PRNGKey(0)
    k_x, k_noise, k_xp, k_x2, k_xq = jax.random.split(key, 5)

    hidden = 32
    directions = 8
    batch, seq = 2, 8

    mod = PerturbedAffine(hidden, directions, antithetic=True)
    # Demo shapes are tiny; force the Pallas path so the kernels are exercised.
    mod.pallas_min_elems = 0

    # --- unperturbed, row-packed lane-dense path (M % k == 0) ---
    x = jax.random.normal(k_x, (batch, seq, hidden), jnp.float32)
    out = mod(x)
    jax.block_until_ready(out)
    ref = x * mod.weight + mod.bias
    assert out.shape == x.shape
    assert jnp.allclose(out, ref, atol=1e-6), "unperturbed mismatch"

    # --- unperturbed, row-packing with row padding (M=7 not a multiple of k=4) ---
    x_odd = jax.random.normal(k_x2, (1, 7, hidden), jnp.float32)
    out_odd = mod(x_odd)
    jax.block_until_ready(out_odd)
    ref_odd = x_odd * mod.weight + mod.bias
    assert out_odd.shape == x_odd.shape
    assert jnp.allclose(out_odd, ref_odd, atol=1e-6), "unperturbed (padded rows) mismatch"

    # --- perturbed, pure-elementwise lane-dense path ---
    mod.set_noise(k_noise, noise_scale=0.1)
    mod.perturbed_flag = True
    xp = jax.random.normal(k_xp, (directions, hidden), jnp.float32)
    out_p = mod(xp)
    jax.block_until_ready(out_p)
    ref_p = xp * mod.weight_noise + mod.bias_noise
    assert out_p.shape == xp.shape
    assert jnp.allclose(out_p, ref_p, atol=1e-6), "perturbed mismatch"

    # --- perturbed, no multiple-of-128 divisor -> Pallas prefix + jnp tail epilogue ---
    mod_t = PerturbedAffine(33, directions, antithetic=True)
    mod_t.pallas_min_elems = 0
    mod_t.set_noise(k_noise, noise_scale=0.05)
    mod_t.perturbed_flag = True
    xq = jax.random.normal(k_xq, (directions, 33), jnp.float32)
    out_q = mod_t(xq)
    jax.block_until_ready(out_q)
    ref_q = xq * mod_t.weight_noise + mod_t.bias_noise
    assert out_q.shape == xq.shape
    assert jnp.allclose(out_q, ref_q, atol=1e-6), "perturbed tail-path mismatch"

    print("KERNEL_OK")
</pallas_src>

<mosaic_0001>
module attributes {stable_mosaic.version = 11 : i64} {
  func.func @_affine_kernel(%arg0: i32, %arg1: i32, %arg2: memref<4x128xf32, #tpu.memory_space<vmem>>, %arg3: memref<1x128xf32, #tpu.memory_space<vmem>>, %arg4: memref<1x128xf32, #tpu.memory_space<vmem>>, %arg5: memref<4x128xf32, #tpu.memory_space<vmem>>) attributes {dimension_semantics = [#tpu.dimension_semantics<parallel>, #tpu.dimension_semantics<parallel>], iteration_bounds = array<i64: 1, 1>, scalar_prefetch = 0 : i64, scratch_operands = 0 : i64, tpu.core_type = #tpu.core_type<tc>, window_params = [{transform_indices = @transform_0, window_bounds = array<i64: 4, 128>}, {transform_indices = @transform_1, window_bounds = array<i64: 1, 128>}, {transform_indices = @transform_2, window_bounds = array<i64: 1, 128>}, {transform_indices = @transform_3, window_bounds = array<i64: 4, 128>}]} {
    %c0 = arith.constant 0 : index
    %c0_0 = arith.constant 0 : index
    %0 = vector.load %arg2[%c0, %c0_0] : memref<4x128xf32, #tpu.memory_space<vmem>>, vector<4x128xf32>
    %c0_1 = arith.constant 0 : index
    %c0_2 = arith.constant 0 : index
    %1 = vector.load %arg3[%c0_1, %c0_2] : memref<1x128xf32, #tpu.memory_space<vmem>>, vector<1x128xf32>
    %c0_3 = arith.constant 0 : index
    %c0_4 = arith.constant 0 : index
    %2 = vector.load %arg4[%c0_3, %c0_4] : memref<1x128xf32, #tpu.memory_space<vmem>>, vector<1x128xf32>
    %3 = vector.broadcast %1 : vector<1x128xf32> to vector<4x128xf32>
    %4 = arith.mulf %0, %3 : vector<4x128xf32>
    %5 = vector.broadcast %2 : vector<1x128xf32> to vector<4x128xf32>
    %6 = arith.addf %4, %5 : vector<4x128xf32>
    %c0_5 = arith.constant 0 : index
    %c0_6 = arith.constant 0 : index
    %7 = vector.load %arg5[%c0_5, %c0_6] : memref<4x128xf32, #tpu.memory_space<vmem>>, vector<4x128xf32>
    tpu.vector_store %arg5[%c0_5, %c0_6], %6 {strides = array<i32>} : memref<4x128xf32, #tpu.memory_space<vmem>>, vector<4x128xf32>,
    return
  }
  func.func @transform_0(%arg0: i32, %arg1: i32) -> (i32, i32) {
    %c0_i32 = arith.constant 0 : i32
    return %arg0, %arg1 : i32, i32
  }
  func.func @transform_1(%arg0: i32, %arg1: i32) -> (i32, i32) {
    %c0_i32 = arith.constant 0 : i32
    %c0_i32_0 = arith.constant 0 : i32
    return %c0_i32, %arg1 : i32, i32
  }
  func.func @transform_2(%arg0: i32, %arg1: i32) -> (i32, i32) {
    %c0_i32 = arith.constant 0 : i32
    %c0_i32_0 = arith.constant 0 : i32
    return %c0_i32, %arg1 : i32, i32
  }
  func.func @transform_3(%arg0: i32, %arg1: i32) -> (i32, i32) {
    %c0_i32 = arith.constant 0 : i32
    return %arg0, %arg1 : i32, i32
  }
}

</mosaic_0001>

<llo_original>
// kernel: tpu_custom_call.1
$region0: #{tpu_custom_call.1}
  #allocation0 [shape = 'u32[]', space=smem, size = 0x4, offset = 0x4, fixed_abs, tag = 'smem constant byte address 0x4 - core index']
  #allocation1 [shape = 'u32[72,128]{1,0:T(1,128)}', space=vmem, size = 0x9000, scoped, tag = 'internal scratch']
  %s0 = inlined_call_operand.hbm [shape: f32[4,128], index: 0, kind: input, shape index: {}]
  %s1 = inlined_call_operand.hbm [shape: f32[1,128], index: 1, kind: input, shape index: {}]
  %s2 = inlined_call_operand.vmem [shape: f32[1,128], index: 2, kind: input, shape index: {}]
  %s3 = inlined_call_operand.hbm [shape: f32[4,128], index: 3, kind: output, shape index: {}]
  %s4 = sld [smem:[#allocation0]]
  $region30: #{tpu_custom_call.1} parent=0
    _
  %s6 = ssub.s32 1, %s4
  %s7 = scalar_select 0, %s6, %s4
  $region1: #{tpu_custom_call.1} parent=0
    #allocation2 [shape = 'u8[2048]{0}', space=vmem, size = 0x800, scoped, tag = 'input window, operand 0, single buffered']
    #allocation3 [shape = 's32[1]{0}', space=sflag, size = 0x4, scoped, tag = 'scoped memory for tpu_custom_call.1']
    #allocation4 [shape = 's32[1]{0}', space=sflag, size = 0x4, scoped, tag = 'scoped memory for tpu_custom_call.1']
    #allocation5 [shape = 'u8[512]{0}', space=vmem, size = 0x400, scoped, tag = 'input window, operand 1, single buffered']
    #allocation6 [shape = 's32[1]{0}', space=sflag, size = 0x4, scoped, tag = 'scoped memory for tpu_custom_call.1']
    #allocation7 [shape = 'u8[2048]{0}', space=vmem, size = 0x800, scoped, tag = 'output window, operand 0, single buffered']
    %8 = vsyncpa [#allocation3], 0
    %9 = vsyncpa [#allocation6], 0
    %10 = vsyncpa [#allocation4], 0
    // Predicated region
    $region2: #{tpu_custom_call.1} parent=1 // pred_check
      _
    $region3: #{tpu_custom_call.1} parent=1 // pred_check_branch
      %12 = sbr.rel (0) target = $region5
    $region4: #{tpu_custom_call.1} parent=1 // pred_region
      %14 = vsyncadd [#allocation3], 0
      %s16 = sshll.u32 %s0, 4
      %s17 = int_to_ptr.hbm [resolvable:$true] %s16
      %s18 = sshll.u32 [#allocation2], 4
      %s19 = int_to_ptr.vmem [resolvable:$true] %s18
      %21 = dma.hbm_to_vmem [thread:$0]  %s17, 64, %s19, [#allocation3]
    $region5: #{tpu_custom_call.1} parent=1 // pred_fallthru
      _
    // Predicated region
    $region6: #{tpu_custom_call.1} parent=1 // pred_check
      _
    $region7: #{tpu_custom_call.1} parent=1 // pred_check_branch
      %23 = sbr.rel (0) target = $region9
    $region8: #{tpu_custom_call.1} parent=1 // pred_region
      %25 = vsyncadd [#allocation6], 0
      %s27 = sshll.u32 %s1, 4
      %s28 = int_to_ptr.hbm [resolvable:$true] %s27
      %s29 = sshll.u32 [#allocation5], 4
      %s30 = int_to_ptr.vmem [resolvable:$true] %s29
      %32 = dma.hbm_to_vmem [thread:$0]  %s28, 16, %s30, [#allocation6]
    $region9: #{tpu_custom_call.1} parent=1 // pred_fallthru
      _
    // Predicated region
    $region10: #{tpu_custom_call.1} parent=1 // pred_check
      _
    $region11: #{tpu_custom_call.1} parent=1 // pred_check_branch
      %34 = sbr.rel (0) target = $region13
    $region12: #{tpu_custom_call.1} parent=1 // pred_region
      _
    $region13: #{tpu_custom_call.1} parent=1 // pred_fallthru
      _
    // Predicated region
    $region14: #{tpu_custom_call.1} parent=1 // pred_check
      _
    $region15: #{tpu_custom_call.1} parent=1 // pred_check_branch
      %36 = sbr.rel (0) target = $region17
    $region16: #{tpu_custom_call.1} parent=1 // pred_region
      %38 = dma.done [#allocation3], 64
    $region17: #{tpu_custom_call.1} parent=1 // pred_fallthru
      _
    // Predicated region
    $region18: #{tpu_custom_call.1} parent=1 // pred_check
      _
    $region19: #{tpu_custom_call.1} parent=1 // pred_check_branch
      %40 = sbr.rel (0) target = $region21
    $region20: #{tpu_custom_call.1} parent=1 // pred_region
      %42 = dma.done [#allocation6], 16
    $region21: #{tpu_custom_call.1} parent=1 // pred_fallthru
      _
    %v43 = vld [vmem:[#allocation2] sm:$0xf]
    %v44 = vld [vmem:[#allocation5] sm:$0x1]
    %v45 = vld [vmem:[%s2] sm:$0x1]
    %v47 = vperm.slane %v44, 0
    %v49 = vmul.f32 %v43, %v47
    %v51 = vperm.slane %v45, 0
    %v53 = vadd.f32 %v49, %v51
    %54 = vst [vmem:[#allocation7] sm:$0xf] %v53
    // Predicated region
    $region22: #{tpu_custom_call.1} parent=1 // pred_check
      _
    $region23: #{tpu_custom_call.1} parent=1 // pred_check_branch
      %56 = sbr.rel (0) target = $region25
    $region24: #{tpu_custom_call.1} parent=1 // pred_region
      %58 = vsyncadd [#allocation4], 0
      %s60 = sshll.u32 [#allocation7], 4
      %s61 = int_to_ptr.vmem [resolvable:$true] %s60
      %s62 = sshll.u32 %s3, 4
      %s63 = int_to_ptr.hbm [resolvable:$true] %s62
      %65 = dma.vmem_to_hbm [thread:$0]  %s61, 64, %s63, [#allocation4]
    $region25: #{tpu_custom_call.1} parent=1 // pred_fallthru
      _
    // Predicated region
    $region26: #{tpu_custom_call.1} parent=1 // pred_check
      _
    $region27: #{tpu_custom_call.1} parent=1 // pred_check_branch
      %67 = sbr.rel (0) target = $region29
    $region28: #{tpu_custom_call.1} parent=1 // pred_region
      %69 = dma.done [#allocation4], 64
    $region29: #{tpu_custom_call.1} parent=1 // pred_fallthru
      _
    %70 = vsyncpa [#allocation3], 1
    %71 = vsyncpa [#allocation6], 1
    %72 = vsyncpa [#allocation4], 1

</llo_original>
